<compile_context>
chip_gen: v5e
topology: v5e:2x2
jax: 0.10.0
libtpu: 0.0.40
codegen_flags: <defaults>
</compile_context>

<pallas_src>
import jax
import jax.numpy as jnp
from jax.experimental import pallas as pl
from jax.experimental.pallas import tpu as pltpu


# ----------------------------------------------------------------------------
# Kernel
# ----------------------------------------------------------------------------
def _linear_kernel(x_ref, w_ref, b_ref, o_ref):
    # x_ref: (TM, E)   w_ref: (E, C)   b_ref: (1, C) f32   o_ref: (TM, C)
    y = jnp.dot(x_ref[...], w_ref[...], preferred_element_type=jnp.float32)
    o_ref[...] = (y + b_ref[...]).astype(o_ref.dtype)


# ----------------------------------------------------------------------------
# Sizing helpers
# ----------------------------------------------------------------------------
def _round_up(x, m):
    return ((x + m - 1) // m) * m


def _sublane_min(dtype):
    """Minimum dense row tile for this dtype (sublane packing factor)."""
    return max(8, 32 // jnp.dtype(dtype).itemsize)   # 8 f32, 16 bf16, 32 i8/fp8


def _padded_tile_bytes(rows, cols, dtype):
    """VMEM bytes of a (rows, cols) tile after (sublane, 128-lane) padding."""
    itemsize = jnp.dtype(dtype).itemsize
    r = _round_up(max(rows, 1), _sublane_min(dtype))
    c = _round_up(max(cols, 1), 128)
    return r * c * itemsize


def _tpu_vmem_capacity_bytes():
    """Per-core VMEM capacity; conservative (v7x) fallback if query fails."""
    try:
        info = pltpu.get_tpu_info()
        cap = getattr(info, "vmem_capacity_bytes", None)
        if cap:
            return int(cap)
    except Exception:
        pass
    return 64 << 20


# ----------------------------------------------------------------------------
# Wrapper
# ----------------------------------------------------------------------------
def classification_head_forward(hidden_state, weight, bias):
    """logits = hidden_state @ weight.T + bias.

    hidden_state: (..., E); weight: (C, E) PyTorch nn.Linear layout; bias: (C,).
    """
    orig_shape = hidden_state.shape
    E = orig_shape[-1]
    C, E_w = weight.shape
    assert E == E_w, "weight inner dim must match embed size"

    x = hidden_state.reshape(-1, E)
    B = x.shape[0]
    itemsize = jnp.dtype(x.dtype).itemsize
    min_tm = _sublane_min(x.dtype)

    # One-time wrapper-side transpose/cast of the tiny (C, E) weight: the MXU
    # then gets a clean (E, C) RHS every step (no per-step relayout).
    w_t = jnp.asarray(weight).T.astype(x.dtype)                 # (E, C)
    b2 = jnp.asarray(bias).astype(jnp.float32).reshape(1, C)    # f32 bias add

    # Per-generation scoped-VMEM ceiling: conservative on 64 MiB v7x,
    # roomier on 128 MiB v5e/v6e.
    vmem_cap = _tpu_vmem_capacity_bytes()
    limit_cap = (36 << 20) if vmem_cap <= (64 << 20) else (64 << 20)

    # Fixed VMEM cost: VMEM-resident weight + bias (counted double-buffered),
    # in padded (sublane, 128-lane) layout.
    fixed = 2 * (_padded_tile_bytes(E, C, w_t.dtype)
                 + _padded_tile_bytes(1, C, jnp.float32))

    if B <= min_tm:
        # Tiny batch: single full-extent block (block dim == array dim is legal).
        tm = B
    else:
        # VMEM bytes per batch row (x tile + padded output tile), x2 for the
        # pipeline's double buffering.
        row_bytes = (_round_up(E, 128) + 128) * itemsize
        avail = max(1 << 20, (limit_cap * 2) // 3 - fixed)
        tm = avail // (2 * row_bytes)
        tm = max(min_tm, min((tm // min_tm) * min_tm, 2048))
        tm = min(tm, _round_up(B, min_tm))
        # v7x megacore: keep >= 2 grid steps so the "parallel" B axis spans
        # both TensorCores (harmless on single-TC v5e/v6e).
        while tm > min_tm and pl.cdiv(B, tm) < 2:
            tm = max(min_tm, ((tm // 2) // min_tm) * min_tm)

    grid = (pl.cdiv(B, tm),)

    # Honest padded-layout VMEM accounting, with headroom, per-generation cap.
    need = (2 * (_padded_tile_bytes(tm, E, x.dtype)
                 + _padded_tile_bytes(tm, C, x.dtype))
            + fixed)
    vmem_limit = min(limit_cap, max(4 << 20, need + need // 2))
    vmem_limit = max(vmem_limit, need + (1 << 20))  # never below real usage

    cost = pl.CostEstimate(
        flops=2 * B * E * C,
        transcendentals=0,
        bytes_accessed=(B * E * itemsize
                        + E * C * jnp.dtype(w_t.dtype).itemsize
                        + B * C * itemsize
                        + C * 4),
    )

    out = pl.pallas_call(
        _linear_kernel,
        out_shape=jax.ShapeDtypeStruct((B, C), x.dtype),
        grid_spec=pltpu.PrefetchScalarGridSpec(
            num_scalar_prefetch=0,
            grid=grid,
            in_specs=[
                pl.BlockSpec((tm, E), lambda i: (i, 0)),   # x streams over B
                pl.BlockSpec((E, C), lambda i: (0, 0)),    # weight: VMEM-resident
                pl.BlockSpec((1, C), lambda i: (0, 0)),    # bias:   VMEM-resident
            ],
            out_specs=pl.BlockSpec((tm, C), lambda i: (i, 0)),
        ),
        compiler_params=pltpu.CompilerParams(
            dimension_semantics=("parallel",),
            vmem_limit_bytes=int(vmem_limit),
        ),
        cost_estimate=cost,
    )(x, w_t, b2)

    return out.reshape(orig_shape[:-1] + (C,))


if __name__ == "__main__":
    class_size = 5       # stored by the module but unused in forward
    embed_size = 32
    batch = 2
    out_features = 3     # nn.Linear(embed_size, 3)

    key = jax.random.PRNGKey(0)
    k_x, k_w, k_b = jax.random.split(key, 3)

    # Deterministic "PyTorch-style" init: U(-1/sqrt(E), 1/sqrt(E))
    bound = 1.0 / (embed_size ** 0.5)
    weight = jax.random.uniform(
        k_w, (out_features, embed_size), jnp.float32, -bound, bound)
    bias = jax.random.uniform(
        k_b, (out_features,), jnp.float32, -bound, bound)

    hidden_state = jax.random.normal(k_x, (batch, embed_size), jnp.float32)

    logits = classification_head_forward(hidden_state, weight, bias)
    logits = jax.block_until_ready(logits)

    # Correctness check against plain-JAX reference.
    ref = hidden_state @ weight.T + bias
    assert logits.shape == (batch, out_features)
    assert jnp.allclose(logits, ref, atol=1e-5, rtol=1e-5)

    print("KERNEL_OK")
</pallas_src>

<mosaic_0001>
module attributes {stable_mosaic.version = 11 : i64} {
  func.func @_linear_kernel(%arg0: i32, %arg1: memref<2x32xf32, #tpu.memory_space<vmem>>, %arg2: memref<32x3xf32, #tpu.memory_space<vmem>>, %arg3: memref<1x3xf32, #tpu.memory_space<vmem>>, %arg4: memref<2x3xf32, #tpu.memory_space<vmem>>) attributes {dimension_semantics = [#tpu.dimension_semantics<parallel>], iteration_bounds = array<i64: 1>, scalar_prefetch = 0 : i64, scratch_operands = 0 : i64, tpu.core_type = #tpu.core_type<tc>, window_params = [{transform_indices = @transform_0, window_bounds = array<i64: 2, 32>}, {pipeline_mode = #tpu.pipeline_mode<synchronous>, transform_indices = @transform_1, window_bounds = array<i64: 32, 3>}, {pipeline_mode = #tpu.pipeline_mode<synchronous>, transform_indices = @transform_2, window_bounds = array<i64: 1, 3>}, {transform_indices = @transform_3, window_bounds = array<i64: 2, 3>}]} {
    %c0 = arith.constant 0 : index
    %c0_0 = arith.constant 0 : index
    %0 = vector.load %arg1[%c0, %c0_0] : memref<2x32xf32, #tpu.memory_space<vmem>>, vector<2x32xf32>
    %c0_1 = arith.constant 0 : index
    %c0_2 = arith.constant 0 : index
    %1 = vector.load %arg2[%c0_1, %c0_2] : memref<32x3xf32, #tpu.memory_space<vmem>>, vector<32x3xf32>
    %cst = arith.constant dense<0.000000e+00> : vector<2x3xf32>
    %2 = tpu.matmul %0, %1, %cst {dimension_numbers = #tpu.dot_dimension_numbers<[1], [0], [0], [1], [0, 0, 1, 1], [], []>} : vector<2x32xf32>, vector<32x3xf32>, vector<2x3xf32> -> vector<2x3xf32>
    %c0_3 = arith.constant 0 : index
    %c0_4 = arith.constant 0 : index
    %3 = vector.load %arg3[%c0_3, %c0_4] : memref<1x3xf32, #tpu.memory_space<vmem>>, vector<1x3xf32>
    %4 = vector.broadcast %3 : vector<1x3xf32> to vector<2x3xf32>
    %5 = arith.addf %2, %4 : vector<2x3xf32>
    %c0_5 = arith.constant 0 : index
    %c0_6 = arith.constant 0 : index
    %6 = vector.load %arg4[%c0_5, %c0_6] : memref<2x3xf32, #tpu.memory_space<vmem>>, vector<2x3xf32>
    tpu.vector_store %arg4[%c0_5, %c0_6], %5 {strides = array<i32>} : memref<2x3xf32, #tpu.memory_space<vmem>>, vector<2x3xf32>,
    return
  }
  func.func @transform_0(%arg0: i32) -> (i32, i32) {
    %c0_i32 = arith.constant 0 : i32
    %c0_i32_0 = arith.constant 0 : i32
    return %arg0, %c0_i32 : i32, i32
  }
  func.func @transform_1(%arg0: i32) -> (i32, i32) {
    %c0_i32 = arith.constant 0 : i32
    %c0_i32_0 = arith.constant 0 : i32
    %c0_i32_1 = arith.constant 0 : i32
    return %c0_i32, %c0_i32_0 : i32, i32
  }
  func.func @transform_2(%arg0: i32) -> (i32, i32) {
    %c0_i32 = arith.constant 0 : i32
    %c0_i32_0 = arith.constant 0 : i32
    %c0_i32_1 = arith.constant 0 : i32
    return %c0_i32, %c0_i32_0 : i32, i32
  }
  func.func @transform_3(%arg0: i32) -> (i32, i32) {
    %c0_i32 = arith.constant 0 : i32
    %c0_i32_0 = arith.constant 0 : i32
    return %arg0, %c0_i32 : i32, i32
  }
}

</mosaic_0001>

<llo_original>
// kernel: tpu_custom_call.1
$region0: #{tpu_custom_call.1}
  #allocation0 [shape = 'u32[]', space=smem, size = 0x4, offset = 0x4, fixed_abs, tag = 'smem constant byte address 0x4 - core index']
  #allocation1 [shape = 'u32[72,128]{1,0:T(1,128)}', space=vmem, size = 0x9000, scoped, tag = 'internal scratch']
  %s0 = inlined_call_operand.vmem [shape: f32[2,32], index: 0, kind: input, shape index: {}]
  %s1 = inlined_call_operand.vmem [shape: f32[32,3], index: 1, kind: input, shape index: {}]
  %s2 = inlined_call_operand.vmem [shape: f32[1,3], index: 2, kind: input, shape index: {}]
  %s3 = inlined_call_operand.hbm [shape: f32[2,3], index: 3, kind: output, shape index: {}]
  %s4 = sld [smem:[#allocation0]]
  $region22: #{tpu_custom_call.1} parent=0
    _
  %s6 = ssub.s32 1, %s4
  %s7 = scalar_select 0, %s6, %s4
  $region1: #{tpu_custom_call.1} parent=0
    #allocation2 [shape = 'u8[1024]{0}', space=vmem, size = 0x400, scoped, tag = 'output window, operand 0, single buffered']
    #allocation3 [shape = 's32[1]{0}', space=sflag, size = 0x4, scoped, tag = 'scoped memory for tpu_custom_call.1']
    %8 = vsyncpa [#allocation3], 0
    // Predicated region
    $region2: #{tpu_custom_call.1} parent=1 // pred_check
      _
    $region3: #{tpu_custom_call.1} parent=1 // pred_check_branch
      %10 = sbr.rel (0) target = $region5
    $region4: #{tpu_custom_call.1} parent=1 // pred_region
      _
    $region5: #{tpu_custom_call.1} parent=1 // pred_fallthru
      _
    // Predicated region
    $region6: #{tpu_custom_call.1} parent=1 // pred_check
      _
    $region7: #{tpu_custom_call.1} parent=1 // pred_check_branch
      %12 = sbr.rel (0) target = $region9
    $region8: #{tpu_custom_call.1} parent=1 // pred_region
      _
    $region9: #{tpu_custom_call.1} parent=1 // pred_fallthru
      _
    // Predicated region
    $region10: #{tpu_custom_call.1} parent=1 // pred_check
      _
    $region11: #{tpu_custom_call.1} parent=1 // pred_check_branch
      %14 = sbr.rel (0) target = $region13
    $region12: #{tpu_custom_call.1} parent=1 // pred_region
      _
    $region13: #{tpu_custom_call.1} parent=1 // pred_fallthru
      _
    %v15 = vld [vmem:[%s0] sm:$0x3]
    %v16 = vld [vmem:[%s1] sm:$0xff]
    %v17 = vld [vmem:[%s1 + $0x8] sm:$0xff]
    %v18 = vld [vmem:[%s1 + $0x10] sm:$0xff]
    %v19 = vld [vmem:[%s1 + $0x18] sm:$0xff]
    %v20 = vld [vmem:[%s2] sm:$0x1]
    %v22 = vperm.slane %v20, 0
    %vm24 = vcmask 261120
    %v26 = vsel %vm24, %v15, 0
    %28 = vmatpush.msra.mxu0 0.0
    %29 = vmatpush.msra.mxu0 0.0
    %30 = vmatpush.msra.mxu0 0.0
    %31 = vmatpush.msra.mxu0 0.0
    %32 = vmatpush.msra.mxu0 0.0
    %33 = vmatpush.msra.mxu0 0.0
    %34 = vmatpush.msra.mxu0 0.0
    %35 = vmatpush.msra.mxu0 0.0
    %36 = vmatpush.msra.mxu0 0.0
    %37 = vmatpush.msra.mxu0 0.0
    %38 = vmatpush.msra.mxu0 0.0
    %39 = vmatpush.msra.mxu0 0.0
    %40 = vmatpush.msra.mxu0 %v19
    %41 = vmatpush.msra.mxu0 %v18
    %42 = vmatpush.msra.mxu0 %v17
    %43 = vmatpush.msra.mxu0 %v16
    %44 = vmatmul.f32.gmra.mxu0 %v26
    %v45 = vpop.f32.mrf.mxu0
    %v46 = vadd.f32 %v22, %v45
    %47 = vdwg.mxu0
    %vm48 = vcmask 17408
    %49 = vst.msk [vmem:[#allocation2] sm:$0x3] %vm48, %v46
    // Predicated region
    $region14: #{tpu_custom_call.1} parent=1 // pred_check
      _
    $region15: #{tpu_custom_call.1} parent=1 // pred_check_branch
      %51 = sbr.rel (0) target = $region17
    $region16: #{tpu_custom_call.1} parent=1 // pred_region
      %53 = vsyncadd [#allocation3], 0
      %s55 = sshll.u32 [#allocation2], 4
      %s56 = int_to_ptr.vmem [resolvable:$true] %s55
      %s57 = sshll.u32 %s3, 4
      %s58 = int_to_ptr.hbm [resolvable:$true] %s57
      %60 = dma.vmem_to_hbm [thread:$0]  %s56, 32, %s58, [#allocation3]
    $region17: #{tpu_custom_call.1} parent=1 // pred_fallthru
      _
    // Predicated region
    $region18: #{tpu_custom_call.1} parent=1 // pred_check
      _
    $region19: #{tpu_custom_call.1} parent=1 // pred_check_branch
      %62 = sbr.rel (0) target = $region21
    $region20: #{tpu_custom_call.1} parent=1 // pred_region
      %64 = dma.done [#allocation3], 32
    $region21: #{tpu_custom_call.1} parent=1 // pred_fallthru
      _
    %65 = vsyncpa [#allocation3], 1

</llo_original>
